<compile_context>
chip_gen: v5e
topology: v5e:2x2
jax: 0.10.0
libtpu: 0.0.40
codegen_flags: <defaults>
</compile_context>

<pallas_src>
import jax
import jax.numpy as jnp
from jax.experimental import pallas as pl
from jax.experimental.pallas import tpu as pltpu

_LANES = 128


def _add_val_grad_kernel(x_ref, val_ref, grad_ref):
    """value = f(x)+g(x) = x*(x+3), grad = df+dg = 2x+3."""
    x = x_ref[...]
    val_ref[...] = x * (x + 3.0)
    grad_ref[...] = 2.0 * x + 3.0


def _add_val_kernel(x_ref, val_ref):
    """grad=False path: only the value stream is computed/written."""
    x = x_ref[...]
    val_ref[...] = x * (x + 3.0)


def _per_stream_block_bytes():
    """Target bytes per stream per grid step: ~2 MiB (v5e/v6e), ~4 MiB (v7x)."""
    vmem_bytes = 128 << 20
    try:
        info = pltpu.get_tpu_info()
        vmem_bytes = getattr(info, "vmem_capacity_bytes", vmem_bytes) or vmem_bytes
    except Exception:
        pass
    # v7x: 64 MiB VMEM/TC but ~3.2 TB/s HBM -> needs bigger tiles to hide the
    # ~0.35 us per-grid-step overhead. v5e/v6e (128 MiB VMEM) are near roofline
    # already at 2 MiB per stream.
    return (4 << 20) if vmem_bytes <= (64 << 20) else (2 << 20)


def add_func_forward(x, grad=True, _max_block_rows=None):
    """JAX wrapper mirroring Add(Pow(I(), 2), Times(I(), 3.0)).forward(x, grad)."""
    if not jnp.issubdtype(x.dtype, jnp.floating):
        raise ValueError(
            f"add_func_forward expects a floating dtype, got {x.dtype}"
        )

    orig_shape = x.shape
    dtype = x.dtype
    itemsize = jnp.dtype(dtype).itemsize
    # Packed sublane minimum per dtype width (f32: 8, bf16: 16, fp8: 32).
    sublane = {4: 8, 2: 16, 1: 32}.get(itemsize, 8)

    total = x.size
    rows = pl.cdiv(total, _LANES)
    # Pad rows only up to the sublane minimum (at most a few KiB of padding),
    # not up to a block multiple -- ragged last blocks are masked by Pallas.
    rows_padded = ((rows + sublane - 1) // sublane) * sublane
    padded_total = rows_padded * _LANES

    # Tile size by bytes per stream per grid step, converted to rows.
    block_rows = _per_stream_block_bytes() // (_LANES * itemsize)
    if _max_block_rows is not None:
        block_rows = min(block_rows, _max_block_rows)
    block_rows = max(sublane, (block_rows // sublane) * sublane)
    block_rows = min(block_rows, rows_padded)

    # Keep >=2 grid steps for inputs over ~1 MiB so the "parallel" grid axis can
    # shard across v7x's two TensorCores (a single-block launch idles one TC).
    total_bytes = rows_padded * _LANES * itemsize
    if rows_padded <= block_rows and total_bytes > (1 << 20):
        half = pl.cdiv(rows_padded, 2)
        block_rows = max(sublane, ((half + sublane - 1) // sublane) * sublane)

    grid = (pl.cdiv(rows_padded, block_rows),)

    x_flat = x.reshape(-1)
    if padded_total != total:
        x_flat = jnp.pad(x_flat, (0, padded_total - total))
    x2d = x_flat.reshape(rows_padded, _LANES)

    spec = pl.BlockSpec((block_rows, _LANES), lambda i: (i, 0))

    num_streams = 3 if grad else 2
    block_bytes = block_rows * _LANES * itemsize
    # Double-buffered footprint + headroom; always <= 48 MiB (safe on v7x's
    # 64 MiB physical VMEM, trivially safe on v5e/v6e's 128 MiB).
    vmem_limit = int(
        min(max(num_streams * 2 * block_bytes + (8 << 20), 16 << 20), 48 << 20)
    )

    cost = pl.CostEstimate(
        flops=(4 if grad else 2) * padded_total,
        transcendentals=0,
        bytes_accessed=num_streams * padded_total * itemsize,
    )
    params = pltpu.CompilerParams(
        dimension_semantics=("parallel",),
        vmem_limit_bytes=vmem_limit,
    )

    if grad:
        val2d, grad2d = pl.pallas_call(
            _add_val_grad_kernel,
            out_shape=(
                jax.ShapeDtypeStruct((rows_padded, _LANES), dtype),
                jax.ShapeDtypeStruct((rows_padded, _LANES), dtype),
            ),
            grid=grid,
            in_specs=[spec],
            out_specs=(spec, spec),
            compiler_params=params,
            cost_estimate=cost,
        )(x2d)
        val = val2d.reshape(-1)[:total].reshape(orig_shape)
        dval = grad2d.reshape(-1)[:total].reshape(orig_shape)
        return val, dval

    val2d = pl.pallas_call(
        _add_val_kernel,
        out_shape=jax.ShapeDtypeStruct((rows_padded, _LANES), dtype),
        grid=grid,
        in_specs=[spec],
        out_specs=spec,
        compiler_params=params,
        cost_estimate=cost,
    )(x2d)
    return val2d.reshape(-1)[:total].reshape(orig_shape)


if __name__ == "__main__":
    key = jax.random.PRNGKey(0)

    # NCHW input, small shape: (2, 4, 16, 16) -> 2048 elements = 16 * 128.
    x = jax.random.normal(key, (2, 4, 16, 16), dtype=jnp.float32)
    val, dval = add_func_forward(x, grad=True)
    jax.block_until_ready((val, dval))

    ref_val = x**2 + 3.0 * x
    ref_grad = 2.0 * x + 3.0
    assert jnp.allclose(val, ref_val, atol=1e-5, rtol=1e-5)
    assert jnp.allclose(dval, ref_grad, atol=1e-5, rtol=1e-5)

    # Non-multiple-of-128 element count exercises the lane-padding path.
    x2 = jax.random.normal(jax.random.PRNGKey(1), (2, 3, 5, 7), dtype=jnp.float32)
    val2, dval2 = add_func_forward(x2, grad=True)
    jax.block_until_ready((val2, dval2))
    assert jnp.allclose(val2, x2**2 + 3.0 * x2, atol=1e-5, rtol=1e-5)
    assert jnp.allclose(dval2, 2.0 * x2 + 3.0, atol=1e-5, rtol=1e-5)

    # Multi-step grid with a ragged (masked) last block: 24 rows, 16-row blocks.
    x3 = jax.random.normal(jax.random.PRNGKey(2), (2, 3, 16, 32), dtype=jnp.float32)
    val3, dval3 = add_func_forward(x3, grad=True, _max_block_rows=16)
    jax.block_until_ready((val3, dval3))
    assert jnp.allclose(val3, x3**2 + 3.0 * x3, atol=1e-5, rtol=1e-5)
    assert jnp.allclose(dval3, 2.0 * x3 + 3.0, atol=1e-5, rtol=1e-5)

    # grad=False uses the dedicated single-output kernel (no wasted grad stream).
    val_only = add_func_forward(x, grad=False)
    jax.block_until_ready(val_only)
    assert jnp.allclose(val_only, ref_val, atol=1e-5, rtol=1e-5)

    print("KERNEL_OK")
</pallas_src>

<mosaic_0001>
module attributes {stable_mosaic.version = 11 : i64} {
  func.func @_add_val_grad_kernel(%arg0: i32, %arg1: memref<16x128xf32, #tpu.memory_space<vmem>>, %arg2: memref<16x128xf32, #tpu.memory_space<vmem>>, %arg3: memref<16x128xf32, #tpu.memory_space<vmem>>) attributes {dimension_semantics = [#tpu.dimension_semantics<parallel>], iteration_bounds = array<i64: 1>, scalar_prefetch = 0 : i64, scratch_operands = 0 : i64, tpu.core_type = #tpu.core_type<tc>, window_params = [{transform_indices = @transform_0, window_bounds = array<i64: 16, 128>}, {transform_indices = @transform_1, window_bounds = array<i64: 16, 128>}, {transform_indices = @transform_2, window_bounds = array<i64: 16, 128>}]} {
    %c0 = arith.constant 0 : index
    %c0_0 = arith.constant 0 : index
    %0 = vector.load %arg1[%c0, %c0_0] : memref<16x128xf32, #tpu.memory_space<vmem>>, vector<16x128xf32>
    %cst = arith.constant 3.000000e+00 : f32
    %1 = vector.broadcast %cst : f32 to vector<16x128xf32>
    %2 = arith.addf %0, %1 : vector<16x128xf32>
    %3 = arith.mulf %0, %2 : vector<16x128xf32>
    %c0_1 = arith.constant 0 : index
    %c0_2 = arith.constant 0 : index
    %4 = vector.load %arg2[%c0_1, %c0_2] : memref<16x128xf32, #tpu.memory_space<vmem>>, vector<16x128xf32>
    tpu.vector_store %arg2[%c0_1, %c0_2], %3 {strides = array<i32>} : memref<16x128xf32, #tpu.memory_space<vmem>>, vector<16x128xf32>,
    %cst_3 = arith.constant 2.000000e+00 : f32
    %5 = vector.broadcast %cst_3 : f32 to vector<16x128xf32>
    %6 = arith.mulf %5, %0 : vector<16x128xf32>
    %cst_4 = arith.constant 3.000000e+00 : f32
    %7 = vector.broadcast %cst_4 : f32 to vector<16x128xf32>
    %8 = arith.addf %6, %7 : vector<16x128xf32>
    %c0_5 = arith.constant 0 : index
    %c0_6 = arith.constant 0 : index
    %9 = vector.load %arg3[%c0_5, %c0_6] : memref<16x128xf32, #tpu.memory_space<vmem>>, vector<16x128xf32>
    tpu.vector_store %arg3[%c0_5, %c0_6], %8 {strides = array<i32>} : memref<16x128xf32, #tpu.memory_space<vmem>>, vector<16x128xf32>,
    return
  }
  func.func @transform_0(%arg0: i32) -> (i32, i32) {
    %c0_i32 = arith.constant 0 : i32
    %c0_i32_0 = arith.constant 0 : i32
    return %arg0, %c0_i32 : i32, i32
  }
  func.func @transform_1(%arg0: i32) -> (i32, i32) {
    %c0_i32 = arith.constant 0 : i32
    %c0_i32_0 = arith.constant 0 : i32
    return %arg0, %c0_i32 : i32, i32
  }
  func.func @transform_2(%arg0: i32) -> (i32, i32) {
    %c0_i32 = arith.constant 0 : i32
    %c0_i32_0 = arith.constant 0 : i32
    return %arg0, %c0_i32 : i32, i32
  }
}

</mosaic_0001>

<llo_original>
// kernel: tpu_custom_call.1
$region0: #{tpu_custom_call.1}
  #allocation0 [shape = 'u32[]', space=smem, size = 0x4, offset = 0x4, fixed_abs, tag = 'smem constant byte address 0x4 - core index']
  #allocation1 [shape = 'u32[72,128]{1,0:T(1,128)}', space=vmem, size = 0x9000, scoped, tag = 'internal scratch']
  %s0 = inlined_call_operand.hbm [shape: f32[16,128], index: 0, kind: input, shape index: {}]
  %s1 = inlined_call_operand.hbm [shape: f32[16,128], index: 1, kind: output, shape index: {0}]
  %s2 = inlined_call_operand.hbm [shape: f32[16,128], index: 2, kind: output, shape index: {1}]
  %3 = xla_tuple %s1, %s2
  %s4 = sld [smem:[#allocation0]]
  $region26: #{tpu_custom_call.1} parent=0
    _
  %s6 = ssub.s32 1, %s4
  %s7 = scalar_select 0, %s6, %s4
  $region1: #{tpu_custom_call.1} parent=0
    #allocation2 [shape = 'u8[8192]{0}', space=vmem, size = 0x2000, scoped, tag = 'input window, operand 0, single buffered']
    #allocation3 [shape = 's32[1]{0}', space=sflag, size = 0x4, scoped, tag = 'scoped memory for tpu_custom_call.1']
    #allocation4 [shape = 's32[1]{0}', space=sflag, size = 0x4, scoped, tag = 'scoped memory for tpu_custom_call.1']
    #allocation5 [shape = 'u8[8192]{0}', space=vmem, size = 0x2000, scoped, tag = 'output window, operand 0, single buffered']
    #allocation6 [shape = 'u8[8192]{0}', space=vmem, size = 0x2000, scoped, tag = 'output window, operand 1, single buffered']
    #allocation7 [shape = 's32[1]{0}', space=sflag, size = 0x4, scoped, tag = 'scoped memory for tpu_custom_call.1']
    %8 = vsyncpa [#allocation3], 0
    %9 = vsyncpa [#allocation4], 0
    %10 = vsyncpa [#allocation7], 0
    // Predicated region
    $region2: #{tpu_custom_call.1} parent=1 // pred_check
      _
    $region3: #{tpu_custom_call.1} parent=1 // pred_check_branch
      %12 = sbr.rel (0) target = $region5
    $region4: #{tpu_custom_call.1} parent=1 // pred_region
      %14 = vsyncadd [#allocation3], 0
      %s15 = sshll.u32 %s0, 4
      %s16 = int_to_ptr.hbm [resolvable:$true] %s15
      %s17 = sshll.u32 [#allocation2], 4
      %s18 = int_to_ptr.vmem [resolvable:$true] %s17
      %23 = dma.hbm_to_vmem [thread:$0]  %s16, 256, %s18, [#allocation3], 128, 128, 8
    $region5: #{tpu_custom_call.1} parent=1 // pred_fallthru
      _
    // Predicated region
    $region6: #{tpu_custom_call.1} parent=1 // pred_check
      _
    $region7: #{tpu_custom_call.1} parent=1 // pred_check_branch
      %25 = sbr.rel (0) target = $region9
    $region8: #{tpu_custom_call.1} parent=1 // pred_region
      %27 = dma.done [#allocation3], 256
    $region9: #{tpu_custom_call.1} parent=1 // pred_fallthru
      _
    %v28 = vld [vmem:[#allocation2] sm:$0xff]
    %v29 = vld [vmem:[#allocation2 + $0x8] sm:$0xff]
    %v30 = vadd.f32 %v28, 3.0
    %v31 = vadd.f32 %v29, 3.0
    %v32 = vmul.f32 %v28, %v30
    %v33 = vmul.f32 %v29, %v31
    %34 = vst [vmem:[#allocation5] sm:$0xff] %v32
    %35 = vst [vmem:[#allocation5 + $0x8] sm:$0xff] %v33
    %v36 = vmul.f32 %v28, 2.0
    %v37 = vmul.f32 %v29, 2.0
    %v38 = vadd.f32 %v36, 3.0
    %v39 = vadd.f32 %v37, 3.0
    %40 = vst [vmem:[#allocation6] sm:$0xff] %v38
    %41 = vst [vmem:[#allocation6 + $0x8] sm:$0xff] %v39
    // Predicated region
    $region10: #{tpu_custom_call.1} parent=1 // pred_check
      _
    $region11: #{tpu_custom_call.1} parent=1 // pred_check_branch
      %43 = sbr.rel (0) target = $region13
    $region12: #{tpu_custom_call.1} parent=1 // pred_region
      %45 = vsyncadd [#allocation4], 0
      %s46 = sshll.u32 [#allocation5], 4
      %s47 = int_to_ptr.vmem [resolvable:$true] %s46
      %s48 = sshll.u32 %s1, 4
      %s49 = int_to_ptr.hbm [resolvable:$true] %s48
      %54 = dma.vmem_to_hbm [thread:$0]  %s47, 256, %s49, [#allocation4], 128, 128, 8
    $region13: #{tpu_custom_call.1} parent=1 // pred_fallthru
      _
    // Predicated region
    $region14: #{tpu_custom_call.1} parent=1 // pred_check
      _
    $region15: #{tpu_custom_call.1} parent=1 // pred_check_branch
      %56 = sbr.rel (0) target = $region17
    $region16: #{tpu_custom_call.1} parent=1 // pred_region
      %58 = vsyncadd [#allocation7], 0
      %s59 = sshll.u32 [#allocation6], 4
      %s60 = int_to_ptr.vmem [resolvable:$true] %s59
      %s61 = sshll.u32 %s2, 4
      %s62 = int_to_ptr.hbm [resolvable:$true] %s61
      %67 = dma.vmem_to_hbm [thread:$0]  %s60, 256, %s62, [#allocation7], 128, 128, 8
    $region17: #{tpu_custom_call.1} parent=1 // pred_fallthru
      _
    // Predicated region
    $region18: #{tpu_custom_call.1} parent=1 // pred_check
      _
    $region19: #{tpu_custom_call.1} parent=1 // pred_check_branch
      %69 = sbr.rel (0) target = $region21
    $region20: #{tpu_custom_call.1} parent=1 // pred_region
      %71 = dma.done [#allocation4], 256
    $region21: #{tpu_custom_call.1} parent=1 // pred_fallthru
      _
    // Predicated region
    $region22: #{tpu_custom_call.1} parent=1 // pred_check
      _
    $region23: #{tpu_custom_call.1} parent=1 // pred_check_branch
      %73 = sbr.rel (0) target = $region25
    $region24: #{tpu_custom_call.1} parent=1 // pred_region
      %75 = dma.done [#allocation7], 256
    $region25: #{tpu_custom_call.1} parent=1 // pred_fallthru
      _
    %76 = vsyncpa [#allocation3], 1
    %77 = vsyncpa [#allocation4], 1
    %78 = vsyncpa [#allocation7], 1

</llo_original>
